<compile_context>
chip_gen: v6e
topology: v6e:2x2x1
jax: 0.10.0
libtpu: 0.0.40
codegen_flags: <defaults>
</compile_context>

<pallas_src>
import jax
import jax.numpy as jnp
from jax.experimental import pallas as pl
from jax.experimental.pallas import tpu as pltpu

input_dim = 2
hidden_dim = 16
output_dim = 1


def mlp_kernel(xt_ref, w1_ref, b1_ref, w2_ref, b2_ref, o_ref):
    """One lane-dense batch tile.

    xt_ref : (input_dim,  TB)        x transposed, batch on the lane axis
    w1_ref : (hidden_dim, input_dim) torch fc1.weight layout (no in-kernel .T)
    b1_ref : (hidden_dim, 1)         fc1 bias as a column
    w2_ref : (hidden_dim, output_dim) fc2.weight pre-transposed in the wrapper
    b2_ref : (output_dim,)           tiny fc2 bias, SMEM scalars
    o_ref  : (output_dim, TB)        lane-dense output tile
    """
    xt = xt_ref[...]                       # (in, TB)
    w1 = w1_ref[...]                       # (hid, in)
    in_dim = w1.shape[1]

    # fc1 on the VPU: broadcast multiply-adds over the tiny K (= input_dim) axis.
    h = w1[:, 0:1] * xt[0:1, :]            # (hid, TB)
    for k in range(1, in_dim):             # static unroll (in_dim == 2)
        h = h + w1[:, k:k + 1] * xt[k:k + 1, :]
    h = jnp.maximum(h + b1_ref[...], 0.0)  # bias broadcast over lanes + ReLU

    # fc2: per output column, weighted sum over the 16 hidden rows
    # (small sublane reduction) + scalar bias read from SMEM.
    w2 = w2_ref[...]                       # (hid, out)
    out_dim = w2.shape[1]
    rows = []
    for j in range(out_dim):               # static unroll (out_dim == 1)
        r = jnp.sum(w2[:, j:j + 1] * h, axis=0, keepdims=True)  # (1, TB)
        rows.append(r + b2_ref[j])
    out = rows[0] if out_dim == 1 else jnp.concatenate(rows, axis=0)
    o_ref[...] = out.astype(o_ref.dtype)


def mlp_forward(x, w1, b1, w2, b2, *, tb=512):
    """MLP forward. x: (B, input_dim) -> (B, output_dim). Torch-layout weights."""
    B, in_dim = x.shape
    hid = w1.shape[0]
    out_dim = w2.shape[0]

    # Lane-dense batch tiles: TB must be a multiple of 128 (f32 lane width).
    tb = max(128, (tb // 128) * 128)
    n_tiles = pl.cdiv(B, tb)
    Bp = n_tiles * tb

    # Transposed, zero-padded input: batch on the lane (minor) axis.
    xt = jnp.zeros((in_dim, Bp), x.dtype).at[:, :B].set(x.T)
    b1c = b1.reshape(hid, 1)               # column bias for lane-broadcast add
    w2c = w2.T                             # (hid, out): transposed ONCE, outside

    out_t = pl.pallas_call(
        mlp_kernel,
        out_shape=jax.ShapeDtypeStruct((out_dim, Bp), x.dtype),
        grid=(n_tiles,),
        in_specs=[
            pl.BlockSpec((in_dim, tb), lambda i: (0, i)),    # x tile, pipelined
            pl.BlockSpec((hid, in_dim), lambda i: (0, 0)),   # weights stay resident
            pl.BlockSpec((hid, 1), lambda i: (0, 0)),
            pl.BlockSpec((hid, out_dim), lambda i: (0, 0)),
            pl.BlockSpec(memory_space=pltpu.SMEM),           # (1,) bias -> SMEM
        ],
        out_specs=pl.BlockSpec((out_dim, tb), lambda i: (0, i)),
        compiler_params=pltpu.CompilerParams(
            # Independent batch tiles: shard across both TCs on v7x megacore;
            # harmless no-op on v5e/v6e.
            dimension_semantics=("parallel",)),
    )(xt, w1, b1c, w2c, b2)

    return out_t[:, :B].T                  # back to (B, output_dim)


def init_params(key):
    # Deterministic init mimicking torch.nn.Linear defaults:
    # U(-1/sqrt(fan_in), 1/sqrt(fan_in)), torch weight/bias shapes.
    k1, k2, k3, k4 = jax.random.split(key, 4)
    bound1 = 1.0 / (input_dim ** 0.5)
    bound2 = 1.0 / (hidden_dim ** 0.5)
    w1 = jax.random.uniform(k1, (hidden_dim, input_dim), jnp.float32,
                            -bound1, bound1)
    b1 = jax.random.uniform(k2, (hidden_dim,), jnp.float32, -bound1, bound1)
    w2 = jax.random.uniform(k3, (output_dim, hidden_dim), jnp.float32,
                            -bound2, bound2)
    b2 = jax.random.uniform(k4, (output_dim,), jnp.float32, -bound2, bound2)
    return w1, b1, w2, b2


if __name__ == "__main__":
    key = jax.random.PRNGKey(0)
    kx, kp = jax.random.split(key)

    # Small but tile-exercising batch: 4 lane-dense tiles of 128.
    B = 512
    x = jax.random.normal(kx, (B, input_dim), jnp.float32)
    w1, b1, w2, b2 = init_params(kp)

    out = mlp_forward(x, w1, b1, w2, b2, tb=128)
    out = jax.block_until_ready(out)

    # Reference check in plain JAX (same math as the PyTorch forward).
    ref = jnp.maximum(x @ w1.T + b1, 0.0) @ w2.T + b2
    assert out.shape == (B, output_dim)
    assert jnp.allclose(out, ref, atol=1e-5, rtol=1e-5)

    print("KERNEL_OK")
</pallas_src>

<mosaic_0001>
module attributes {stable_mosaic.version = 11 : i64} {
  func.func @mlp_kernel(%arg0: i32, %arg1: memref<2x128xf32, #tpu.memory_space<vmem>>, %arg2: memref<16x2xf32, #tpu.memory_space<vmem>>, %arg3: memref<16x1xf32, #tpu.memory_space<vmem>>, %arg4: memref<16x1xf32, #tpu.memory_space<vmem>>, %arg5: memref<1xf32, #tpu.memory_space<smem>>, %arg6: memref<1x128xf32, #tpu.memory_space<vmem>>) attributes {dimension_semantics = [#tpu.dimension_semantics<parallel>], iteration_bounds = array<i64: 4>, scalar_prefetch = 0 : i64, scratch_operands = 0 : i64, tpu.core_type = #tpu.core_type<tc>, window_params = [{transform_indices = @transform_0, window_bounds = array<i64: 2, 128>}, {pipeline_mode = #tpu.pipeline_mode<synchronous>, transform_indices = @transform_1, window_bounds = array<i64: 16, 2>}, {pipeline_mode = #tpu.pipeline_mode<synchronous>, transform_indices = @transform_2, window_bounds = array<i64: 16, 1>}, {pipeline_mode = #tpu.pipeline_mode<synchronous>, transform_indices = @transform_3, window_bounds = array<i64: 16, 1>}, {transform_indices = @transform_4, window_bounds = array<i64: 1>}, {transform_indices = @transform_5, window_bounds = array<i64: 1, 128>}]} {
    %c0 = arith.constant 0 : index
    %c0_0 = arith.constant 0 : index
    %0 = vector.load %arg1[%c0, %c0_0] : memref<2x128xf32, #tpu.memory_space<vmem>>, vector<2x128xf32>
    %c0_1 = arith.constant 0 : index
    %c0_2 = arith.constant 0 : index
    %1 = vector.load %arg2[%c0_1, %c0_2] : memref<16x2xf32, #tpu.memory_space<vmem>>, vector<16x2xf32>
    %2 = vector.extract_strided_slice %1 {offsets = [0, 0], sizes = [16, 1], strides = [1, 1]} : vector<16x2xf32> to vector<16x1xf32>
    %3 = vector.extract_strided_slice %0 {offsets = [0, 0], sizes = [1, 128], strides = [1, 1]} : vector<2x128xf32> to vector<1x128xf32>
    %4 = vector.broadcast %2 : vector<16x1xf32> to vector<16x128xf32>
    %5 = vector.broadcast %3 : vector<1x128xf32> to vector<16x128xf32>
    %6 = arith.mulf %4, %5 : vector<16x128xf32>
    %7 = vector.extract_strided_slice %1 {offsets = [0, 1], sizes = [16, 1], strides = [1, 1]} : vector<16x2xf32> to vector<16x1xf32>
    %8 = vector.extract_strided_slice %0 {offsets = [1, 0], sizes = [1, 128], strides = [1, 1]} : vector<2x128xf32> to vector<1x128xf32>
    %9 = vector.broadcast %7 : vector<16x1xf32> to vector<16x128xf32>
    %10 = vector.broadcast %8 : vector<1x128xf32> to vector<16x128xf32>
    %11 = arith.mulf %9, %10 : vector<16x128xf32>
    %12 = arith.addf %6, %11 : vector<16x128xf32>
    %c0_3 = arith.constant 0 : index
    %c0_4 = arith.constant 0 : index
    %13 = vector.load %arg3[%c0_3, %c0_4] : memref<16x1xf32, #tpu.memory_space<vmem>>, vector<16x1xf32>
    %14 = vector.broadcast %13 : vector<16x1xf32> to vector<16x128xf32>
    %15 = arith.addf %12, %14 : vector<16x128xf32>
    %cst = arith.constant 0.000000e+00 : f32
    %16 = vector.broadcast %cst : f32 to vector<16x128xf32>
    %17 = arith.maximumf %15, %16 : vector<16x128xf32>
    %c0_5 = arith.constant 0 : index
    %c0_6 = arith.constant 0 : index
    %18 = vector.load %arg4[%c0_5, %c0_6] : memref<16x1xf32, #tpu.memory_space<vmem>>, vector<16x1xf32>
    %19 = vector.broadcast %18 : vector<16x1xf32> to vector<16x128xf32>
    %20 = arith.mulf %19, %17 : vector<16x128xf32>
    %cst_7 = arith.constant dense<0.000000e+00> : vector<128xf32>
    %21 = vector.multi_reduction <add>, %20, %cst_7 [0] : vector<16x128xf32> to vector<128xf32>
    %22 = vector.shape_cast %21 : vector<128xf32> to vector<1x128xf32>
    %c0_8 = arith.constant 0 : index
    %23 = memref.load %arg5[%c0_8] : memref<1xf32, #tpu.memory_space<smem>>
    %24 = vector.broadcast %23 : f32 to vector<1x128xf32>
    %25 = arith.addf %22, %24 : vector<1x128xf32>
    %c0_9 = arith.constant 0 : index
    %c0_10 = arith.constant 0 : index
    %26 = vector.load %arg6[%c0_9, %c0_10] : memref<1x128xf32, #tpu.memory_space<vmem>>, vector<1x128xf32>
    tpu.vector_store %arg6[%c0_9, %c0_10], %25 {strides = array<i32>} : memref<1x128xf32, #tpu.memory_space<vmem>>, vector<1x128xf32>,
    return
  }
  func.func @transform_0(%arg0: i32) -> (i32, i32) {
    %c0_i32 = arith.constant 0 : i32
    %c0_i32_0 = arith.constant 0 : i32
    return %c0_i32, %arg0 : i32, i32
  }
  func.func @transform_1(%arg0: i32) -> (i32, i32) {
    %c0_i32 = arith.constant 0 : i32
    %c0_i32_0 = arith.constant 0 : i32
    %c0_i32_1 = arith.constant 0 : i32
    return %c0_i32, %c0_i32_0 : i32, i32
  }
  func.func @transform_2(%arg0: i32) -> (i32, i32) {
    %c0_i32 = arith.constant 0 : i32
    %c0_i32_0 = arith.constant 0 : i32
    %c0_i32_1 = arith.constant 0 : i32
    return %c0_i32, %c0_i32_0 : i32, i32
  }
  func.func @transform_3(%arg0: i32) -> (i32, i32) {
    %c0_i32 = arith.constant 0 : i32
    %c0_i32_0 = arith.constant 0 : i32
    %c0_i32_1 = arith.constant 0 : i32
    return %c0_i32, %c0_i32_0 : i32, i32
  }
  func.func @transform_4(%arg0: i32) -> i32 {
    %c0_i32 = arith.constant 0 : i32
    %c0_i32_0 = arith.constant 0 : i32
    return %c0_i32 : i32
  }
  func.func @transform_5(%arg0: i32) -> (i32, i32) {
    %c0_i32 = arith.constant 0 : i32
    %c0_i32_0 = arith.constant 0 : i32
    return %c0_i32, %arg0 : i32, i32
  }
}

</mosaic_0001>

<llo_original>
// kernel: tpu_custom_call.1
$region0: #{tpu_custom_call.1}
  #allocation0 [shape = 'u32[]', space=smem, size = 0x4, offset = 0x4, fixed_abs, tag = 'smem constant byte address 0x4 - core index']
  #allocation1 [shape = 'u32[144,128]{1,0:T(1,128)}', space=vmem, size = 0x12000, scoped, tag = 'internal scratch']
  #allocation2 [shape = 'f32[1]{0:T(128)S(6)}', space=smem, size = 0x200, scoped, tag = 'scoped memory for tpu_custom_call.1']
  %s0 = inlined_call_operand.vmem [shape: f32[2,512], index: 0, kind: input, shape index: {}]
  %s1 = inlined_call_operand.vmem [shape: f32[16,2], index: 1, kind: input, shape index: {}]
  %s2 = inlined_call_operand.vmem [shape: f32[16,1], index: 2, kind: input, shape index: {}]
  %s3 = inlined_call_operand.vmem [shape: f32[16,1], index: 3, kind: input, shape index: {}]
  %s4 = inlined_call_operand.<no memory space> [shape: f32[1], index: 4, kind: input, shape index: {}]
  %s5 = inlined_call_operand.hbm [shape: f32[1,512], index: 5, kind: output, shape index: {}]
  %s6 = sld [smem:[#allocation0]]
  $region53: #{tpu_custom_call.1} parent=0
    _
  %s8 = ssub.s32 1, %s6
  %s9 = scalar_select 0, %s8, %s6
  %10 = sst [smem:[#allocation2]] %s4
  $region1: #{tpu_custom_call.1} parent=0
    #allocation3 [shape = 'u8[1024]{0}', space=vmem, size = 0x400, scoped, tag = 'output window, operand 0']
    #allocation4 [shape = 's32[2]{0}', space=sflag, size = 0x8, scoped, tag = 'scoped memory for tpu_custom_call.1']
    %11 = vsyncpa [#allocation4], 0
    %s12 = scalar_lea.sflag [#allocation4], 1
    %13 = vsyncpa %s12, 0
    loop: start=0, step=1, limit=6
    $region2: #{tpu_custom_call.1} parent=1 // loop_pre_header
      _
    $region3: #{tpu_custom_call.1} parent=1 // loop_header
      %s15 = sphi 0, %s19
      %p16 = scmp.ge.s32.totalorder %s15, 6
      %s25 = sphi 0, %s27
      %s28 = sphi 0, %s25
      %s29 = sphi 0, %s28
      %s45 = sphi 0, %s29
      %s49 = sphi 0, %s49
      %s51 = sphi 0, %s49
      %s52 = sphi 0, %s51
      %s66 = sphi 0, %s52
      %s70 = sphi 0, %s70
      %s72 = sphi 0, %s70
      %s73 = sphi 0, %s72
      %s87 = sphi 0, %s73
      %s91 = sphi 0, %s91
      %s93 = sphi 0, %s91
      %s94 = sphi 0, %s93
      %s108 = sphi 0, %s94
      %s112 = sphi 0, %s112
      %s114 = sphi 0, %s112
      %s115 = sphi 0, %s114
      %s129 = sphi 0, %s115
      %s135 = sphi 0, %s137
      %s138 = sphi 0, %s135
      %s139 = sphi 0, %s138
      %s155 = sphi 0, %s139
    $region4: #{tpu_custom_call.1} parent=1 // loop_header_branch
      %18 = sbr.rel (%p16) target = $region8
    $region5: #{tpu_custom_call.1} parent=1 // loop_body
      %s20 = ssub.s32 %s15, 1
      %s21 = ssub.s32 %s15, 2
      %s22 = sadd.s32 %s15, 1
      %s23 = ssub.s32 %s15, %s22
      %p24 = scmp.eq.s32.totalorder %s23, 0
      %s26 = sadd.s32 %s25, 1
      %s27 = scalar_select %p24, %s25, %s26
      %p30 = pneg %p24
      %p31 = scmp.eq.s32.totalorder %s15, 3
      %p32 = por %p30, %p31
      %p33 = scmp.ne.s32.totalorder %s25, %s28
      %p34 = scmp.eq.s32.totalorder %s15, 0
      %p35 = por %p33, %p34
      %p36 = scmp.ne.s32.totalorder %s25, %s28
      %p37 = scmp.eq.s32.totalorder %s20, 3
      %p38 = por %p36, %p37
      %p39 = scmp.ne.s32.totalorder %s28, %s29
      %p40 = scmp.eq.s32.totalorder %s20, 0
      %p41 = por %p39, %p40
      %p42 = scmp.ne.s32.totalorder %s28, %s29
      %p43 = scmp.eq.s32.totalorder %s21, 3
      %p44 = por %p42, %p43
      %p46 = scmp.ne.s32.totalorder %s29, %s45
      %p47 = scmp.eq.s32.totalorder %s21, 0
      %p48 = por %p46, %p47
      %s50 = sadd.s32 %s49, 1
      %p53 = scmp.eq.s32.totalorder %s15, 3
      %p54 = scmp.ne.s32.totalorder %s49, %s51
      %p55 = scmp.eq.s32.totalorder %s15, 0
      %p56 = por %p54, %p55
      %p57 = scmp.ne.s32.totalorder %s49, %s51
      %p58 = scmp.eq.s32.totalorder %s20, 3
      %p59 = por %p57, %p58
      %p60 = scmp.ne.s32.totalorder %s51, %s52
      %p61 = scmp.eq.s32.totalorder %s20, 0
      %p62 = por %p60, %p61
      %p63 = scmp.ne.s32.totalorder %s51, %s52
      %p64 = scmp.eq.s32.totalorder %s21, 3
      %p65 = por %p63, %p64
      %p67 = scmp.ne.s32.totalorder %s52, %s66
      %p68 = scmp.eq.s32.totalorder %s21, 0
      %p69 = por %p67, %p68
      %s71 = sadd.s32 %s70, 1
      %p74 = scmp.eq.s32.totalorder %s15, 3
      %p75 = scmp.ne.s32.totalorder %s70, %s72
      %p76 = scmp.eq.s32.totalorder %s15, 0
      %p77 = por %p75, %p76
      %p78 = scmp.ne.s32.totalorder %s70, %s72
      %p79 = scmp.eq.s32.totalorder %s20, 3
      %p80 = por %p78, %p79
      %p81 = scmp.ne.s32.totalorder %s72, %s73
      %p82 = scmp.eq.s32.totalorder %s20, 0
      %p83 = por %p81, %p82
      %p84 = scmp.ne.s32.totalorder %s72, %s73
      %p85 = scmp.eq.s32.totalorder %s21, 3
      %p86 = por %p84, %p85
      %p88 = scmp.ne.s32.totalorder %s73, %s87
      %p89 = scmp.eq.s32.totalorder %s21, 0
      %p90 = por %p88, %p89
      %s92 = sadd.s32 %s91, 1
      %p95 = scmp.eq.s32.totalorder %s15, 3
      %p96 = scmp.ne.s32.totalorder %s91, %s93
      %p97 = scmp.eq.s32.totalorder %s15, 0
      %p98 = por %p96, %p97
      %p99 = scmp.ne.s32.totalorder %s91, %s93
      %p100 = scmp.eq.s32.totalorder %s20, 3
      %p101 = por %p99, %p100
      %p102 = scmp.ne.s32.totalorder %s93, %s94
      %p103 = scmp.eq.s32.totalorder %s20, 0
      %p104 = por %p102, %p103
      %p105 = scmp.ne.s32.totalorder %s93, %s94
      %p106 = scmp.eq.s32.totalorder %s21, 3
      %p107 = por %p105, %p106
      %p109 = scmp.ne.s32.totalorder %s94, %s108
      %p110 = scmp.eq.s32.totalorder %s21, 0
      %p111 = por %p109, %p110
      %s113 = sadd.s32 %s112, 1
      %p116 = scmp.eq.s32.totalorder %s15, 3
      %p117 = scmp.ne.s32.totalorder %s112, %s114
      %p118 = scmp.eq.s32.totalorder %s15, 0
      %p119 = por %p117, %p118
      %p120 = scmp.ne.s32.totalorder %s112, %s114
      %p121 = scmp.eq.s32.totalorder %s20, 3
      %p122 = por %p120, %p121
      %p123 = scmp.ne.s32.totalorder %s114, %s115
      %p124 = scmp.eq.s32.totalorder %s20, 0
      %p125 = por %p123, %p124
      %p126 = scmp.ne.s32.totalorder %s114, %s115
      %p127 = scmp.eq.s32.totalorder %s21, 3
      %p128 = por %p126, %p127
      %p130 = scmp.ne.s32.totalorder %s115, %s129
      %p131 = scmp.eq.s32.totalorder %s21, 0
      %p132 = por %p130, %p131
      %s133 = ssub.s32 %s15, %s22
      %p134 = scmp.eq.s32.totalorder %s133, 0
      %s136 = sadd.s32 %s135, 1
      %s137 = scalar_select %p134, %s135, %s136
      %p140 = pneg %p134
      %p141 = scmp.eq.s32.totalorder %s15, 3
      %p142 = por %p140, %p141
      %p143 = scmp.ne.s32.totalorder %s135, %s138
      %p144 = scmp.eq.s32.totalorder %s15, 0
      %p145 = por %p143, %p144
      %p146 = scmp.ne.s32.totalorder %s135, %s138
      %p147 = scmp.eq.s32.totalorder %s20, 3
      %p148 = por %p146, %p147
      %p149 = scmp.ne.s32.totalorder %s138, %s139
      %p150 = scmp.eq.s32.totalorder %s20, 0
      %p151 = por %p149, %p150
      %p152 = scmp.ne.s32.totalorder %s138, %s139
      %p153 = scmp.eq.s32.totalorder %s21, 3
      %p154 = por %p152, %p153
      %p156 = scmp.ne.s32.totalorder %s139, %s155
      %p157 = scmp.eq.s32.totalorder %s21, 0
      %p158 = por %p156, %p157
      %p159 = scmp.le.s32.totalorder 1, %s15
      %p160 = scmp.lt.s32.totalorder %s15, 5
      %p161 = pnand %p159, %p160
      %p162 = pneg %p161
      // Predicated region
      $region9: #{tpu_custom_call.1} parent=5 // pred_check
        _
      $region10: #{tpu_custom_call.1} parent=5 // pred_check_branch
        %164 = sbr.rel (%p161) target = $region12
      $region11: #{tpu_custom_call.1} parent=5 // pred_region
        %s165 = ssub.s32 %s15, 1
        // Predicated region
        $region13: #{tpu_custom_call.1} parent=11 // pred_check
          %p166 = pneg %p62
        $region14: #{tpu_custom_call.1} parent=11 // pred_check_branch
          %168 = sbr.rel (%p166) target = $region16
        $region15: #{tpu_custom_call.1} parent=11 // pred_region
          _
        $region16: #{tpu_custom_call.1} parent=11 // pred_fallthru
          _
        // Predicated region
        $region17: #{tpu_custom_call.1} parent=11 // pred_check
          %p169 = pneg %p83
        $region18: #{tpu_custom_call.1} parent=11 // pred_check_branch
          %171 = sbr.rel (%p169) target = $region20
        $region19: #{tpu_custom_call.1} parent=11 // pred_region
          _
        $region20: #{tpu_custom_call.1} parent=11 // pred_fallthru
          _
        // Predicated region
        $region21: #{tpu_custom_call.1} parent=11 // pred_check
          %p172 = pneg %p104
        $region22: #{tpu_custom_call.1} parent=11 // pred_check_branch
          %174 = sbr.rel (%p172) target = $region24
        $region23: #{tpu_custom_call.1} parent=11 // pred_region
          _
        $region24: #{tpu_custom_call.1} parent=11 // pred_fallthru
          _
        // Predicated region
        $region25: #{tpu_custom_call.1} parent=11 // pred_check
          %p175 = pneg %p125
        $region26: #{tpu_custom_call.1} parent=11 // pred_check_branch
          %177 = sbr.rel (%p175) target = $region28
        $region27: #{tpu_custom_call.1} parent=11 // pred_region
          _
        $region28: #{tpu_custom_call.1} parent=11 // pred_fallthru
          _
      $region12: #{tpu_custom_call.1} parent=5 // pred_fallthru
        _
      %p178 = scmp.lt.s32.totalorder %s15, 4
      // Predicated region
      $region29: #{tpu_custom_call.1} parent=5 // pred_check
        %p179 = pneg %p178
      $region30: #{tpu_custom_call.1} parent=5 // pred_check_branch
        %181 = sbr.rel (%p179) target = $region32
      $region31: #{tpu_custom_call.1} parent=5 // pred_region
        // Predicated region
        $region33: #{tpu_custom_call.1} parent=31 // pred_check
          %p182 = pneg %p35
        $region34: #{tpu_custom_call.1} parent=31 // pred_check_branch
          %184 = sbr.rel (%p182) target = $region36
        $region35: #{tpu_custom_call.1} parent=31 // pred_region
          %p185 = scmp.lt.s32.totalorder %s15, 3
          %s186 = scalar_select %p185, %s15, 3
          %s187 = smul.addr %s186, 2
          %s188 = scalar_lea.vmem %s0, %s187
        $region36: #{tpu_custom_call.1} parent=31 // pred_fallthru
          _
      $region32: #{tpu_custom_call.1} parent=5 // pred_fallthru
        _
      %p189 = scmp.le.s32.totalorder 1, %s15
      %p190 = scmp.lt.s32.totalorder %s15, 5
      %p191 = pnand %p189, %p190
      %p192 = pneg %p191
      // Predicated region
      $region37: #{tpu_custom_call.1} parent=5 // pred_check
        _
      $region38: #{tpu_custom_call.1} parent=5 // pred_check_branch
        %194 = sbr.rel (%p191) target = $region40
      $region39: #{tpu_custom_call.1} parent=5 // pred_region
        %s195 = ssub.s32 %s15, 1
        %p196 = scmp.lt.s32.totalorder %s20, 3
        %s197 = scalar_select %p196, %s20, 3
        %s198 = smul.addr %s197, 2
        %s199 = scalar_lea.vmem %s0, %s198
        %p200 = pneg %p41
        %p201 = pneg %p38
        %p202 = pneg %p62
        %p203 = pneg %p59
        %p204 = pneg %p83
        %p205 = pneg %p80
        %p206 = pneg %p104
        %p207 = pneg %p101
        %p208 = pneg %p125
        %p209 = pneg %p122
        %p210 = pneg %p151
        %p211 = pneg %p148
        %s212 = sand.u32 %s138, 1
        %s213 = scalar_lea.sflag [#allocation4], %s212
        %s214 = sand.u32 %s138, 1
        %s215 = scalar_lea.vmem [#allocation3], %s214
        %p216 = scmp.lt.s32.totalorder %s20, 3
        %s217 = scalar_select %p216, %s20, 3
        %s218 = smul.addr %s217, 2
        %s219 = scalar_lea.vmem %s0, %s218
        %v220 = vld [vmem:[%s219] sm:$0x3]
        %v221 = vld [vmem:[%s1] sm:$0xff]
        %v222 = vld [vmem:[%s1 + $0x8] sm:$0xff]
        %224 = vset.pattern.permute.xlu0 0
        %225 = vperm.xlu0 %224, %v221
        %v226 = vpop.permute.xlu0 %225
        %229 = vset.pattern.permute.xlu0 0
        %230 = vperm.xlu0 %229, %v222
        %v231 = vpop.permute.xlu0 %230
        %v233 = vlaneseq
        %v234 = vshrl.u32 %v233, 7
        %v235 = vsub.s32 0, %v234
        %v236 = vrot.slane %v220, %v235
        %v237 = vmul.f32 %v226, %v236
        %v238 = vmul.f32 %v231, %v236
        %239 = vset.pattern.permute.xlu0 1
        %240 = vperm.xlu0 %239, %v221
        %v241 = vpop.permute.xlu0 %240
        %243 = vset.pattern.permute.xlu0 1
        %244 = vperm.xlu0 %243, %v222
        %v245 = vpop.permute.xlu0 %244
        %v247 = vlaneseq
        %v248 = vshrl.u32 %v247, 7
        %v249 = vsub.s32 1, %v248
        %v250 = vrot.slane %v220, %v249
        %v251 = vmul.f32 %v241, %v250
        %v252 = vmul.f32 %v245, %v250
        %v253 = vadd.f32 %v237, %v251
        %v254 = vadd.f32 %v238, %v252
        %v255 = vld [vmem:[%s2] sm:$0xff]
        %v256 = vld [vmem:[%s2 + $0x8] sm:$0xff]
        %258 = vset.pattern.permute.xlu0 0
        %259 = vperm.xlu0 %258, %v255
        %v260 = vpop.permute.xlu0 %259
        %263 = vset.pattern.permute.xlu0 0
        %264 = vperm.xlu0 %263, %v256
        %v265 = vpop.permute.xlu0 %264
        %v267 = vadd.f32 %v253, %v260
        %v268 = vadd.f32 %v254, %v265
        %v269 = vmax.f32 %v267, 0.0
        %v270 = vmax.f32 %v268, 0.0
        %v271 = vld [vmem:[%s3] sm:$0xff]
        %v272 = vld [vmem:[%s3 + $0x8] sm:$0xff]
        %274 = vset.pattern.permute.xlu0 0
        %275 = vperm.xlu0 %274, %v271
        %v276 = vpop.permute.xlu0 %275
        %279 = vset.pattern.permute.xlu0 0
        %280 = vperm.xlu0 %279, %v272
        %v281 = vpop.permute.xlu0 %280
        %v283 = vmul.f32 %v276, %v269
        %v284 = vmul.f32 %v281, %v270
        %v285 = vadd.f32 %v283, %v284
        %v286 = vrot.slane %v285, 4
        %v287 = vadd.f32 %v285, %v286
        %v288 = vrot.slane %v287, 2
        %v289 = vadd.f32 %v287, %v288
        %v290 = vrot.slane %v289, 1
        %v291 = vadd.f32 %v289, %v290
        %s292 = sld [smem:[#allocation2]]
        %v293 = vstv %s292
        %v294 = vadd.f32 %v291, %v293
        %295 = vst [vmem:[%s215] sm:$0x1] %v294
        %s296 = sand.u32 %s138, 1
        %s297 = scalar_lea.sflag [#allocation4], %s296
        %s298 = sand.u32 %s138, 1
        %s299 = scalar_lea.vmem [#allocation3], %s298
        // Predicated region
        $region41: #{tpu_custom_call.1} parent=39 // pred_check
          %p300 = pneg %p148
        $region42: #{tpu_custom_call.1} parent=39 // pred_check_branch
          %302 = sbr.rel (%p300) target = $region44
        $region43: #{tpu_custom_call.1} parent=39 // pred_region
          %s304 = ssub.s32 16, 16
          %305 = vsyncadd %s297, %s304
          %s306 = smul.addr %s20, 16
          %s307 = scalar_lea.hbm %s5, %s306
          %s309 = sshll.u32 %s299, 4
          %s310 = int_to_ptr.vmem [resolvable:$true] %s309
          %312 = dma.vmem_to_hbm [thread:$0]  %s310, 16, %s307, %s297
        $region44: #{tpu_custom_call.1} parent=39 // pred_fallthru
          _
      $region40: #{tpu_custom_call.1} parent=5 // pred_fallthru
        _
      %p313 = scmp.le.s32.totalorder 2, %s15
      // Predicated region
      $region45: #{tpu_custom_call.1} parent=5 // pred_check
        %p314 = pneg %p313
      $region46: #{tpu_custom_call.1} parent=5 // pred_check_branch
        %316 = sbr.rel (%p314) target = $region48
      $region47: #{tpu_custom_call.1} parent=5 // pred_region
        %s317 = ssub.s32 %s15, 2
        // Predicated region
        $region49: #{tpu_custom_call.1} parent=47 // pred_check
          %p318 = pneg %p154
        $region50: #{tpu_custom_call.1} parent=47 // pred_check_branch
          %320 = sbr.rel (%p318) target = $region52
        $region51: #{tpu_custom_call.1} parent=47 // pred_region
          %s321 = sand.u32 %s139, 1
          %s322 = scalar_lea.sflag [#allocation4], %s321
          %s323 = sand.u32 %s139, 1
          %s324 = scalar_lea.vmem [#allocation3], %s323
          %325 = dma.done %s322, 16
        $region52: #{tpu_custom_call.1} parent=47 // pred_fallthru
          _
      $region48: #{tpu_custom_call.1} parent=5 // pred_fallthru
        _
    $region6: #{tpu_custom_call.1} parent=1 // loop_footer
      %s19 = sadd.s32 1, %s15
    $region7: #{tpu_custom_call.1} parent=1 // loop_footer_branch
      %14 = sbr.rel target = $region3
    $region8: #{tpu_custom_call.1} parent=1 // loop_exit
      _
    %326 = vsyncpa [#allocation4], 1
    %s327 = scalar_lea.sflag [#allocation4], 1
    %328 = vsyncpa %s327, 1

</llo_original>
